<compile_context>
chip_gen: v5e
topology: v5e:2x2
jax: 0.10.0
libtpu: 0.0.40
codegen_flags: <defaults>
</compile_context>

<pallas_src>
import functools

import jax
import jax.numpy as jnp
from jax.experimental import pallas as pl
from jax.experimental.pallas import tpu as pltpu


# ------------------------------ helpers --------------------------------------

def _round_up(x, m):
    return ((x + m - 1) // m) * m


_FUSED_VMEM_BUDGET = 24 * 1024 * 1024          # stay under v7x scoped default
_VMEM_LIMIT_BYTES = 32 * 1024 * 1024           # explicit (v5e default is 16 MiB)


def _fused_vmem_bytes(n_p, params_padded):
    """Rough VMEM footprint of the everything-resident fused kernel."""
    a_bytes = n_p * n_p * 2                    # bf16 adjacency
    cin0_p = params_padded[0][0].shape[0]
    feat = n_p * cin0_p * 4
    wb = 0
    max_c = cin0_p
    for (w_pad, b_pad, _, _) in params_padded:
        wb += w_pad.size * 2 + b_pad.size * 4
        max_c = max(max_c, w_pad.shape[1])
    interm = 3 * n_p * max_c * 4               # live f32 intermediates + bf16 copies
    out_bytes = n_p * params_padded[-1][0].shape[1] * 4
    return a_bytes + feat + wb + interm + out_bytes


def _fused_a_first_flags(params_padded):
    # Feed the narrower feature matrix to the (N x N) aggregation matmul.
    return tuple(w.shape[0] < w.shape[1] for (w, _, _, _) in params_padded)


def _pick_block(n_p, pref=256):
    # v6e/v7x MXUs are 2x256x256 -> prefer 256; n_p is always a 128 multiple.
    if n_p % pref == 0 and n_p >= pref:
        return pref
    return min(n_p, 128)


# ------------------------- fused (resident) kernel ----------------------------

def _fused_gnn_kernel(*refs, num_layers, a_first_flags):
    """All layers fused; everything resident in VMEM/vregs.

    refs = (a_ref, x_ref, w_0, b_0, ..., w_{L-1}, b_{L-1}, o_ref)
      a_ref : [Np, Np]   bf16 normalized adjacency (zero padded, Np % 128 == 0)
      x_ref : [Np, C0p]  f32 node features (zero padded)
      w_i   : [Cip, Cop] bf16 layer weight (zero padded)
      b_i   : [1,  Cop]  f32 layer bias (zero padded)
      o_ref : [Np, CLp]  f32 output (lane dense)
    """
    a_ref, x_ref = refs[0], refs[1]
    o_ref = refs[-1]
    wb_refs = refs[2:-1]

    a = a_ref[...]                                   # bf16
    h = x_ref[...]                                   # f32
    for i in range(num_layers):
        w = wb_refs[2 * i][...]                      # bf16
        b = wb_refs[2 * i + 1][...]                  # f32
        if a_first_flags[i]:
            ah = jnp.dot(a, h.astype(jnp.bfloat16),
                         preferred_element_type=jnp.float32)
            h = jnp.dot(ah.astype(jnp.bfloat16), w,
                        preferred_element_type=jnp.float32) + b
        else:
            hw = jnp.dot(h.astype(jnp.bfloat16), w,
                         preferred_element_type=jnp.float32)
            h = jnp.dot(a, hw.astype(jnp.bfloat16),
                        preferred_element_type=jnp.float32) + b
        if i != num_layers - 1:                      # no activation on last conv
            h = jnp.maximum(h, 0.0)
    o_ref[...] = h.astype(o_ref.dtype)


def _gnn_fused_call(a_bf16, x_pad, params_padded):
    n_p = a_bf16.shape[0]
    num_layers = len(params_padded)
    a_first = _fused_a_first_flags(params_padded)
    cout_last_p = params_padded[-1][0].shape[1]

    in_specs = [pl.BlockSpec((n_p, n_p), lambda: (0, 0)),
                pl.BlockSpec(x_pad.shape, lambda: (0, 0))]
    args = [a_bf16, x_pad]
    for (w_pad, b_pad, _, _) in params_padded:
        in_specs.append(pl.BlockSpec(w_pad.shape, lambda: (0, 0)))
        in_specs.append(pl.BlockSpec(b_pad.shape, lambda: (0, 0)))
        args += [w_pad, b_pad]

    kernel = functools.partial(_fused_gnn_kernel, num_layers=num_layers,
                               a_first_flags=a_first)
    return pl.pallas_call(
        kernel,
        out_shape=jax.ShapeDtypeStruct((n_p, cout_last_p), jnp.float32),
        in_specs=in_specs,
        out_specs=pl.BlockSpec((n_p, cout_last_p), lambda: (0, 0)),
        compiler_params=pltpu.CompilerParams(vmem_limit_bytes=_VMEM_LIMIT_BYTES),
    )(*args)


# ----------------------- tiled (gridded) per-layer kernel ---------------------

def _gcn_layer_tiled_kernel(a_ref, h_ref, w_ref, b_ref, o_ref, acc_ref, *,
                            apply_relu):
    """One GCN layer: out[i] = relu( (sum_k A[i,k] @ h[k]) @ W + b ).

    grid = (row blocks 'parallel', K chunks 'arbitrary').
    acc_ref is an f32 VMEM accumulator resident across the K axis.
    """
    k = pl.program_id(1)

    @pl.when(k == 0)
    def _():
        acc_ref[...] = jnp.zeros_like(acc_ref)

    acc_ref[...] += jnp.dot(a_ref[...], h_ref[...].astype(jnp.bfloat16),
                            preferred_element_type=jnp.float32)

    @pl.when(k == pl.num_programs(1) - 1)
    def _():
        out = jnp.dot(acc_ref[...].astype(jnp.bfloat16), w_ref[...],
                      preferred_element_type=jnp.float32) + b_ref[...]
        if apply_relu:
            out = jnp.maximum(out, 0.0)
        o_ref[...] = out.astype(o_ref.dtype)


def _gcn_layer_tiled(a_bf16, h_f32, w_pad, b_pad, *, apply_relu):
    n_p = a_bf16.shape[0]
    cin_p, cout_p = w_pad.shape
    bm = _pick_block(n_p)
    bk = _pick_block(n_p)
    grid = (n_p // bm, n_p // bk)

    kernel = functools.partial(_gcn_layer_tiled_kernel, apply_relu=apply_relu)
    return pl.pallas_call(
        kernel,
        out_shape=jax.ShapeDtypeStruct((n_p, cout_p), jnp.float32),
        grid_spec=pltpu.PrefetchScalarGridSpec(
            num_scalar_prefetch=0,
            grid=grid,
            in_specs=[
                pl.BlockSpec((bm, bk), lambda i, k: (i, k)),        # A row/K block
                pl.BlockSpec((bk, cin_p), lambda i, k: (k, 0)),     # h K block
                pl.BlockSpec((cin_p, cout_p), lambda i, k: (0, 0)),  # W (resident)
                pl.BlockSpec((1, cout_p), lambda i, k: (0, 0)),      # bias
            ],
            out_specs=pl.BlockSpec((bm, cout_p), lambda i, k: (i, 0)),
            scratch_shapes=[pltpu.VMEM((bm, cin_p), jnp.float32)],
        ),
        compiler_params=pltpu.CompilerParams(
            dimension_semantics=("parallel", "arbitrary"),
            vmem_limit_bytes=_VMEM_LIMIT_BYTES,
        ),
    )(a_bf16, h_f32, w_pad, b_pad)


def _gnn_tiled_call(a_bf16, x_pad, params_padded):
    num_layers = len(params_padded)
    h = x_pad
    for i, (w_pad, b_pad, _, _) in enumerate(params_padded):
        h = _gcn_layer_tiled(a_bf16, h, w_pad, b_pad,
                             apply_relu=(i != num_layers - 1))
    return h


# ------------------------------- JAX glue -------------------------------------

def gcn_norm_dense(edge_index, num_nodes, num_nodes_padded=None):
    """Dense symmetric GCN normalization with self loops: D^-1/2 (A+I) D^-1/2.

    Builds the result directly at the padded size (padded rows/cols stay zero).
    Duplicate edges accumulate (matches message-passing summation); assumes no
    pre-existing self-loops.
    """
    n_p = num_nodes if num_nodes_padded is None else num_nodes_padded
    src, dst = edge_index[0], edge_index[1]
    a = jnp.zeros((n_p, n_p), jnp.float32)
    a = a.at[dst, src].add(1.0)               # row i aggregates messages into node i
    diag = (jnp.arange(n_p) < num_nodes).astype(jnp.float32)
    a = a + jnp.diag(diag)                    # self loops only for real nodes
    deg = a.sum(axis=1)
    dinv = jnp.where(deg > 0, jax.lax.rsqrt(jnp.maximum(deg, 1e-12)), 0.0)
    return a * dinv[:, None] * dinv[None, :]


def glorot(key, shape):
    fan_in, fan_out = shape
    limit = (6.0 / (fan_in + fan_out)) ** 0.5
    return jax.random.uniform(key, shape, jnp.float32, -limit, limit)


def init_basic_gnn_params(key, in_channels, hidden_channels, num_layers,
                          out_channels):
    """Mirrors BasicGNN.__init__ conv construction (jk=None, out_channels set)."""
    dims = []
    cin = in_channels
    if num_layers > 1:
        dims.append((cin, hidden_channels))
        cin = hidden_channels
    for _ in range(num_layers - 2):
        dims.append((cin, hidden_channels))
        cin = hidden_channels
    dims.append((cin, out_channels))          # _is_conv_to_out branch
    params = []
    for ci, co in dims:
        key, sub = jax.random.split(key)
        w = glorot(sub, (ci, co))
        b = jnp.zeros((co,), jnp.float32)     # GCNConv bias init = zeros
        params.append((w, b))
    return params


def prepare_gnn_params(params):
    """One-time padding/casting of layer weights (hoisted out of the hot path)."""
    padded = []
    for (w, b) in params:
        cin, cout = w.shape
        cin_p, cout_p = _round_up(cin, 128), _round_up(cout, 128)
        w_pad = jnp.zeros((cin_p, cout_p), jnp.bfloat16)
        w_pad = w_pad.at[:cin, :cout].set(w.astype(jnp.bfloat16))
        b_pad = jnp.zeros((1, cout_p), jnp.float32).at[0, :cout].set(b)
        padded.append((w_pad, b_pad, cin, cout))
    return padded


def basic_gnn_forward(x, a_bf16, params_padded, *, force_tiled=False):
    """BasicGNN.forward with GCNConv layers, relu, norm=None, jk=None, p=0.

    `a_bf16` is the padded bf16 normalized adjacency (precomputed once per
    graph).  Fused single-call path when everything fits VMEM, otherwise the
    tiled per-layer grid.
    """
    n, cin0 = x.shape
    n_p = a_bf16.shape[0]
    cin0_p = params_padded[0][0].shape[0]
    x_pad = jnp.pad(x.astype(jnp.float32), ((0, n_p - n), (0, cin0_p - cin0)))

    use_fused = (not force_tiled) and (
        _fused_vmem_bytes(n_p, params_padded) <= _FUSED_VMEM_BUDGET)
    if use_fused:
        out_pad = _gnn_fused_call(a_bf16, x_pad, params_padded)
    else:
        out_pad = _gnn_tiled_call(a_bf16, x_pad, params_padded)
    return out_pad[:n, :params_padded[-1][3]]


# ------------------------------- references ------------------------------------

def basic_gnn_forward_ref_f32(x, a_norm, params):
    num_layers = len(params)
    h = x
    for i, (w, b) in enumerate(params):
        h = a_norm @ (h @ w) + b[None, :]
        if i != num_layers - 1:
            h = jnp.maximum(h, 0.0)
    return h


def basic_gnn_forward_ref_matched(x, a_norm, params, a_first_flags):
    """Pure-JAX reference that mirrors the kernel's bf16/f32 recipe exactly."""
    a = a_norm.astype(jnp.bfloat16)
    h = x.astype(jnp.float32)
    num_layers = len(params)
    for i, (w, b) in enumerate(params):
        wb = w.astype(jnp.bfloat16)
        if a_first_flags[i]:
            ah = jnp.dot(a, h.astype(jnp.bfloat16),
                         preferred_element_type=jnp.float32)
            h = jnp.dot(ah.astype(jnp.bfloat16), wb,
                        preferred_element_type=jnp.float32) + b[None, :]
        else:
            hw = jnp.dot(h.astype(jnp.bfloat16), wb,
                         preferred_element_type=jnp.float32)
            h = jnp.dot(a, hw.astype(jnp.bfloat16),
                        preferred_element_type=jnp.float32) + b[None, :]
        if i != num_layers - 1:
            h = jnp.maximum(h, 0.0)
    return h


# --------------------------------- main ----------------------------------------

def make_graph(key, num_nodes, n_extra=8):
    """Deterministic graph: a ring plus a few random chords (directed pairs)."""
    ring_src = jnp.arange(num_nodes, dtype=jnp.int32)
    ring_dst = (ring_src + 1) % num_nodes
    extra_src = jax.random.randint(key, (n_extra,), 0, num_nodes, dtype=jnp.int32)
    extra_dst = (extra_src + 5) % num_nodes
    src = jnp.concatenate([ring_src, ring_dst, extra_src])
    dst = jnp.concatenate([ring_dst, ring_src, extra_dst])
    return jnp.stack([src, dst], axis=0)


if __name__ == "__main__":
    key = jax.random.PRNGKey(0)
    in_channels, hidden_channels, out_channels, num_layers = 8, 32, 16, 3
    k_p, k1x, k1e, k2x, k2e = jax.random.split(key, 5)

    params = init_basic_gnn_params(k_p, in_channels, hidden_channels,
                                   num_layers, out_channels)
    params_padded = prepare_gnn_params(params)            # one-time padding/cast

    def run_case(kx, ke, num_nodes, force_tiled):
        x = jax.random.normal(kx, (num_nodes, in_channels), jnp.float32)
        edge_index = make_graph(ke, num_nodes)
        n_p = _round_up(num_nodes, 128)
        # Graph preprocessing hoisted out of the per-forward hot path.
        a_pad = jax.block_until_ready(gcn_norm_dense(edge_index, num_nodes, n_p))
        a_bf16 = a_pad.astype(jnp.bfloat16)

        out = basic_gnn_forward(x, a_bf16, params_padded, force_tiled=force_tiled)
        out = jax.block_until_ready(out)
        assert out.shape == (num_nodes, out_channels)

        a_norm = a_pad[:num_nodes, :num_nodes]
        if force_tiled:
            flags = (True,) * num_layers                   # tiled path aggregates first
        else:
            flags = _fused_a_first_flags(params_padded)
        ref_matched = basic_gnn_forward_ref_matched(x, a_norm, params, flags)
        ref_f32 = basic_gnn_forward_ref_f32(x, a_norm, params)
        assert jnp.allclose(out, ref_matched, atol=1e-2, rtol=1e-2), \
            "mismatch vs bf16-matched reference"
        assert jnp.allclose(out, ref_f32, atol=5e-2, rtol=5e-2), \
            "mismatch vs f32 reference"

    # Small graph -> fused, everything-resident single pallas_call.
    run_case(k1x, k1e, num_nodes=16, force_tiled=False)
    # Larger graph -> row-block ('parallel') x K-chunk ('arbitrary') tiled grid.
    run_case(k2x, k2e, num_nodes=300, force_tiled=True)

    print("KERNEL_OK")
</pallas_src>

<mosaic_0001>
module attributes {stable_mosaic.version = 11 : i64} {
  func.func @_fused_gnn_kernel(%arg0: memref<128x128xbf16, #tpu.memory_space<vmem>>, %arg1: memref<128x128xf32, #tpu.memory_space<vmem>>, %arg2: memref<128x128xbf16, #tpu.memory_space<vmem>>, %arg3: memref<1x128xf32, #tpu.memory_space<vmem>>, %arg4: memref<128x128xbf16, #tpu.memory_space<vmem>>, %arg5: memref<1x128xf32, #tpu.memory_space<vmem>>, %arg6: memref<128x128xbf16, #tpu.memory_space<vmem>>, %arg7: memref<1x128xf32, #tpu.memory_space<vmem>>, %arg8: memref<128x128xf32, #tpu.memory_space<vmem>>) attributes {dimension_semantics = [], scalar_prefetch = 0 : i64, scratch_operands = 0 : i64, tpu.core_type = #tpu.core_type<tc>} {
    %c0 = arith.constant 0 : index
    %c0_0 = arith.constant 0 : index
    %0 = vector.load %arg0[%c0, %c0_0] : memref<128x128xbf16, #tpu.memory_space<vmem>>, vector<128x128xbf16>
    %c0_1 = arith.constant 0 : index
    %c0_2 = arith.constant 0 : index
    %1 = vector.load %arg1[%c0_1, %c0_2] : memref<128x128xf32, #tpu.memory_space<vmem>>, vector<128x128xf32>
    %c0_3 = arith.constant 0 : index
    %c0_4 = arith.constant 0 : index
    %2 = vector.load %arg2[%c0_3, %c0_4] : memref<128x128xbf16, #tpu.memory_space<vmem>>, vector<128x128xbf16>
    %c0_5 = arith.constant 0 : index
    %c0_6 = arith.constant 0 : index
    %3 = vector.load %arg3[%c0_5, %c0_6] : memref<1x128xf32, #tpu.memory_space<vmem>>, vector<1x128xf32>
    %4 = arith.truncf %1 : vector<128x128xf32> to vector<128x128xbf16>
    %cst = arith.constant dense<0.000000e+00> : vector<128x128xf32>
    %5 = tpu.matmul %4, %2, %cst {dimension_numbers = #tpu.dot_dimension_numbers<[1], [0], [0], [1], [0, 0, 1, 1], [], []>} : vector<128x128xbf16>, vector<128x128xbf16>, vector<128x128xf32> -> vector<128x128xf32>
    %6 = arith.truncf %5 : vector<128x128xf32> to vector<128x128xbf16>
    %cst_7 = arith.constant dense<0.000000e+00> : vector<128x128xf32>
    %7 = tpu.matmul %0, %6, %cst_7 {dimension_numbers = #tpu.dot_dimension_numbers<[1], [0], [0], [1], [0, 0, 1, 1], [], []>} : vector<128x128xbf16>, vector<128x128xbf16>, vector<128x128xf32> -> vector<128x128xf32>
    %8 = vector.broadcast %3 : vector<1x128xf32> to vector<128x128xf32>
    %9 = arith.addf %7, %8 : vector<128x128xf32>
    %cst_8 = arith.constant 0.000000e+00 : f32
    %10 = vector.broadcast %cst_8 : f32 to vector<128x128xf32>
    %11 = arith.maximumf %9, %10 : vector<128x128xf32>
    %c0_9 = arith.constant 0 : index
    %c0_10 = arith.constant 0 : index
    %12 = vector.load %arg4[%c0_9, %c0_10] : memref<128x128xbf16, #tpu.memory_space<vmem>>, vector<128x128xbf16>
    %c0_11 = arith.constant 0 : index
    %c0_12 = arith.constant 0 : index
    %13 = vector.load %arg5[%c0_11, %c0_12] : memref<1x128xf32, #tpu.memory_space<vmem>>, vector<1x128xf32>
    %14 = arith.truncf %11 : vector<128x128xf32> to vector<128x128xbf16>
    %cst_13 = arith.constant dense<0.000000e+00> : vector<128x128xf32>
    %15 = tpu.matmul %14, %12, %cst_13 {dimension_numbers = #tpu.dot_dimension_numbers<[1], [0], [0], [1], [0, 0, 1, 1], [], []>} : vector<128x128xbf16>, vector<128x128xbf16>, vector<128x128xf32> -> vector<128x128xf32>
    %16 = arith.truncf %15 : vector<128x128xf32> to vector<128x128xbf16>
    %cst_14 = arith.constant dense<0.000000e+00> : vector<128x128xf32>
    %17 = tpu.matmul %0, %16, %cst_14 {dimension_numbers = #tpu.dot_dimension_numbers<[1], [0], [0], [1], [0, 0, 1, 1], [], []>} : vector<128x128xbf16>, vector<128x128xbf16>, vector<128x128xf32> -> vector<128x128xf32>
    %18 = vector.broadcast %13 : vector<1x128xf32> to vector<128x128xf32>
    %19 = arith.addf %17, %18 : vector<128x128xf32>
    %cst_15 = arith.constant 0.000000e+00 : f32
    %20 = vector.broadcast %cst_15 : f32 to vector<128x128xf32>
    %21 = arith.maximumf %19, %20 : vector<128x128xf32>
    %c0_16 = arith.constant 0 : index
    %c0_17 = arith.constant 0 : index
    %22 = vector.load %arg6[%c0_16, %c0_17] : memref<128x128xbf16, #tpu.memory_space<vmem>>, vector<128x128xbf16>
    %c0_18 = arith.constant 0 : index
    %c0_19 = arith.constant 0 : index
    %23 = vector.load %arg7[%c0_18, %c0_19] : memref<1x128xf32, #tpu.memory_space<vmem>>, vector<1x128xf32>
    %24 = arith.truncf %21 : vector<128x128xf32> to vector<128x128xbf16>
    %cst_20 = arith.constant dense<0.000000e+00> : vector<128x128xf32>
    %25 = tpu.matmul %24, %22, %cst_20 {dimension_numbers = #tpu.dot_dimension_numbers<[1], [0], [0], [1], [0, 0, 1, 1], [], []>} : vector<128x128xbf16>, vector<128x128xbf16>, vector<128x128xf32> -> vector<128x128xf32>
    %26 = arith.truncf %25 : vector<128x128xf32> to vector<128x128xbf16>
    %cst_21 = arith.constant dense<0.000000e+00> : vector<128x128xf32>
    %27 = tpu.matmul %0, %26, %cst_21 {dimension_numbers = #tpu.dot_dimension_numbers<[1], [0], [0], [1], [0, 0, 1, 1], [], []>} : vector<128x128xbf16>, vector<128x128xbf16>, vector<128x128xf32> -> vector<128x128xf32>
    %28 = vector.broadcast %23 : vector<1x128xf32> to vector<128x128xf32>
    %29 = arith.addf %27, %28 : vector<128x128xf32>
    %c0_22 = arith.constant 0 : index
    %c0_23 = arith.constant 0 : index
    %30 = vector.load %arg8[%c0_22, %c0_23] : memref<128x128xf32, #tpu.memory_space<vmem>>, vector<128x128xf32>
    tpu.vector_store %arg8[%c0_22, %c0_23], %29 {strides = array<i32>} : memref<128x128xf32, #tpu.memory_space<vmem>>, vector<128x128xf32>,
    return
  }
}

</mosaic_0001>

<llo_original>
// kernel: tpu_custom_call.1
$region0: #{tpu_custom_call.1}
  #allocation0 [shape = 'u32[]', space=smem, size = 0x4, offset = 0x4, fixed_abs, tag = 'smem constant byte address 0x4 - core index']
  #allocation1 [shape = 'u32[72,128]{1,0:T(1,128)}', space=vmem, size = 0x9000, scoped, tag = 'internal scratch']
  %s0 = inlined_call_operand.hbm [shape: bf16[128,128], index: 0, kind: input, shape index: {}]
  %s1 = inlined_call_operand.hbm [shape: f32[128,128], index: 1, kind: input, shape index: {}]
  %s2 = inlined_call_operand.hbm [shape: bf16[128,128], index: 2, kind: input, shape index: {}]
  %s3 = inlined_call_operand.vmem [shape: f32[1,128], index: 3, kind: input, shape index: {}]
  %s4 = inlined_call_operand.hbm [shape: bf16[128,128], index: 4, kind: input, shape index: {}]
  %s5 = inlined_call_operand.vmem [shape: f32[1,128], index: 5, kind: input, shape index: {}]
  %s6 = inlined_call_operand.hbm [shape: bf16[128,128], index: 6, kind: input, shape index: {}]
  %s7 = inlined_call_operand.vmem [shape: f32[1,128], index: 7, kind: input, shape index: {}]
  %s8 = inlined_call_operand.hbm [shape: f32[128,128], index: 8, kind: output, shape index: {}]
  %s9 = sld [smem:[#allocation0]]
  $region62: #{tpu_custom_call.1} parent=0
    _
  %s11 = ssub.s32 1, %s9
  %s12 = scalar_select 0, %s11, %s9
  $region1: #{tpu_custom_call.1} parent=0
    #allocation2 [shape = 'u8[32768]{0}', space=vmem, size = 0x8000, scoped, tag = 'input window, operand 0, single buffered']
    #allocation3 [shape = 's32[1]{0}', space=sflag, size = 0x4, scoped, tag = 'scoped memory for tpu_custom_call.1']
    #allocation4 [shape = 's32[1]{0}', space=sflag, size = 0x4, scoped, tag = 'scoped memory for tpu_custom_call.1']
    #allocation5 [shape = 'u8[65536]{0}', space=vmem, size = 0x10000, scoped, tag = 'input window, operand 1, single buffered']
    #allocation6 [shape = 's32[1]{0}', space=sflag, size = 0x4, scoped, tag = 'scoped memory for tpu_custom_call.1']
    #allocation7 [shape = 'u8[32768]{0}', space=vmem, size = 0x8000, scoped, tag = 'input window, operand 2, single buffered']
    #allocation8 [shape = 'u8[32768]{0}', space=vmem, size = 0x8000, scoped, tag = 'input window, operand 4, single buffered']
    #allocation9 [shape = 's32[1]{0}', space=sflag, size = 0x4, scoped, tag = 'scoped memory for tpu_custom_call.1']
    #allocation10 [shape = 'u8[32768]{0}', space=vmem, size = 0x8000, scoped, tag = 'input window, operand 6, single buffered']
    #allocation11 [shape = 'u8[65536]{0}', space=vmem, size = 0x10000, scoped, tag = 'output window, operand 0, single buffered']
    %13 = vsyncpa [#allocation3], 0
    %14 = vsyncpa [#allocation6], 0
    %15 = vsyncpa [#allocation9], 0
    %16 = vsyncpa [#allocation4], 0
    // Predicated region
    $region2: #{tpu_custom_call.1} parent=1 // pred_check
      _
    $region3: #{tpu_custom_call.1} parent=1 // pred_check_branch
      %18 = sbr.rel (0) target = $region5
    $region4: #{tpu_custom_call.1} parent=1 // pred_region
      %20 = vsyncadd [#allocation3], 0
      %s21 = sshll.u32 %s0, 4
      %s22 = int_to_ptr.hbm [resolvable:$true] %s21
      %s23 = sshll.u32 [#allocation2], 4
      %s24 = int_to_ptr.vmem [resolvable:$true] %s23
      %29 = dma.hbm_to_vmem [thread:$0]  %s22, 1024, %s24, [#allocation3], 64, 64, 4
    $region5: #{tpu_custom_call.1} parent=1 // pred_fallthru
      _
    // Predicated region
    $region6: #{tpu_custom_call.1} parent=1 // pred_check
      _
    $region7: #{tpu_custom_call.1} parent=1 // pred_check_branch
      %31 = sbr.rel (0) target = $region9
    $region8: #{tpu_custom_call.1} parent=1 // pred_region
      %33 = vsyncadd [#allocation6], 0
      %s34 = sshll.u32 %s1, 4
      %s35 = int_to_ptr.hbm [resolvable:$true] %s34
      %s36 = sshll.u32 [#allocation5], 4
      %s37 = int_to_ptr.vmem [resolvable:$true] %s36
      %42 = dma.hbm_to_vmem [thread:$0]  %s35, 2048, %s37, [#allocation6], 128, 128, 8
    $region9: #{tpu_custom_call.1} parent=1 // pred_fallthru
      _
    // Predicated region
    $region10: #{tpu_custom_call.1} parent=1 // pred_check
      _
    $region11: #{tpu_custom_call.1} parent=1 // pred_check_branch
      %44 = sbr.rel (0) target = $region13
    $region12: #{tpu_custom_call.1} parent=1 // pred_region
      %46 = vsyncadd [#allocation6], 0
      %s47 = sshll.u32 %s2, 4
      %s48 = int_to_ptr.hbm [resolvable:$true] %s47
      %s49 = sshll.u32 [#allocation7], 4
      %s50 = int_to_ptr.vmem [resolvable:$true] %s49
      %55 = dma.hbm_to_vmem [thread:$0]  %s48, 1024, %s50, [#allocation6], 64, 64, 4
    $region13: #{tpu_custom_call.1} parent=1 // pred_fallthru
      _
    // Predicated region
    $region14: #{tpu_custom_call.1} parent=1 // pred_check
      _
    $region15: #{tpu_custom_call.1} parent=1 // pred_check_branch
      %57 = sbr.rel (0) target = $region17
    $region16: #{tpu_custom_call.1} parent=1 // pred_region
      _
    $region17: #{tpu_custom_call.1} parent=1 // pred_fallthru
      _
    // Predicated region
    $region18: #{tpu_custom_call.1} parent=1 // pred_check
      _
    $region19: #{tpu_custom_call.1} parent=1 // pred_check_branch
      %59 = sbr.rel (0) target = $region21
    $region20: #{tpu_custom_call.1} parent=1 // pred_region
      %61 = vsyncadd [#allocation9], 0
      %s62 = sshll.u32 %s4, 4
      %s63 = int_to_ptr.hbm [resolvable:$true] %s62
      %s64 = sshll.u32 [#allocation8], 4
      %s65 = int_to_ptr.vmem [resolvable:$true] %s64
      %70 = dma.hbm_to_vmem [thread:$0]  %s63, 1024, %s65, [#allocation9], 64, 64, 4
    $region21: #{tpu_custom_call.1} parent=1 // pred_fallthru
      _
    // Predicated region
    $region22: #{tpu_custom_call.1} parent=1 // pred_check
      _
    $region23: #{tpu_custom_call.1} parent=1 // pred_check_branch
      %72 = sbr.rel (0) target = $region25
    $region24: #{tpu_custom_call.1} parent=1 // pred_region
      _
    $region25: #{tpu_custom_call.1} parent=1 // pred_fallthru
      _
    // Predicated region
    $region26: #{tpu_custom_call.1} parent=1 // pred_check
      _
    $region27: #{tpu_custom_call.1} parent=1 // pred_check_branch
      %74 = sbr.rel (0) target = $region29
    $region28: #{tpu_custom_call.1} parent=1 // pred_region
      %76 = vsyncadd [#allocation9], 0
      %s77 = sshll.u32 %s6, 4
      %s78 = int_to_ptr.hbm [resolvable:$true] %s77
      %s79 = sshll.u32 [#allocation10], 4
      %s80 = int_to_ptr.vmem [resolvable:$true] %s79
      %85 = dma.hbm_to_vmem [thread:$0]  %s78, 1024, %s80, [#allocation9], 64, 64, 4
    $region29: #{tpu_custom_call.1} parent=1 // pred_fallthru
      _
    // Predicated region
    $region30: #{tpu_custom_call.1} parent=1 // pred_check
      _
    $region31: #{tpu_custom_call.1} parent=1 // pred_check_branch
      %87 = sbr.rel (0) target = $region33
    $region32: #{tpu_custom_call.1} parent=1 // pred_region
      _
    $region33: #{tpu_custom_call.1} parent=1 // pred_fallthru
      _
    // Predicated region
    $region34: #{tpu_custom_call.1} parent=1 // pred_check
      _
    $region35: #{tpu_custom_call.1} parent=1 // pred_check_branch
      %89 = sbr.rel (0) target = $region37
    $region36: #{tpu_custom_call.1} parent=1 // pred_region
      %91 = dma.done [#allocation3], 1024
    $region37: #{tpu_custom_call.1} parent=1 // pred_fallthru
      _
    // Predicated region
    $region38: #{tpu_custom_call.1} parent=1 // pred_check
      _
    $region39: #{tpu_custom_call.1} parent=1 // pred_check_branch
      %93 = sbr.rel (0) target = $region41
    $region40: #{tpu_custom_call.1} parent=1 // pred_region
      %95 = dma.done [#allocation6], 2048
    $region41: #{tpu_custom_call.1} parent=1 // pred_fallthru
      _
    // Predicated region
    $region42: #{tpu_custom_call.1} parent=1 // pred_check
      _
    $region43: #{tpu_custom_call.1} parent=1 // pred_check_branch
      %97 = sbr.rel (0) target = $region45
    $region44: #{tpu_custom_call.1} parent=1 // pred_region
      %99 = dma.done [#allocation6], 1024
    $region45: #{tpu_custom_call.1} parent=1 // pred_fallthru
      _
    // Predicated region
    $region46: #{tpu_custom_call.1} parent=1 // pred_check
      _
    $region47: #{tpu_custom_call.1} parent=1 // pred_check_branch
      %101 = sbr.rel (0) target = $region49
    $region48: #{tpu_custom_call.1} parent=1 // pred_region
      %103 = dma.done [#allocation9], 1024
    $region49: #{tpu_custom_call.1} parent=1 // pred_fallthru
      _
    // Predicated region
    $region50: #{tpu_custom_call.1} parent=1 // pred_check
      _
    $region51: #{tpu_custom_call.1} parent=1 // pred_check_branch
      %105 = sbr.rel (0) target = $region53
    $region52: #{tpu_custom_call.1} parent=1 // pred_region
      %107 = dma.done [#allocation9], 1024
    $region53: #{tpu_custom_call.1} parent=1 // pred_fallthru
      _
    %v108 = vld [vmem:[#allocation2] sm:$0xf]
    %v109 = vld [vmem:[#allocation2 + $0x4] sm:$0xf]
    %v110 = vld [vmem:[#allocation2 + $0x8] sm:$0xf]
    %v111 = vld [vmem:[#allocation2 + $0xc] sm:$0xf]
    %v112 = vld [vmem:[#allocation2 + $0x10] sm:$0xf]
    %v113 = vld [vmem:[#allocation2 + $0x14] sm:$0xf]
    %v114 = vld [vmem:[#allocation2 + $0x18] sm:$0xf]
    %v115 = vld [vmem:[#allocation2 + $0x1c] sm:$0xf]
    %v116 = vld [vmem:[#allocation2 + $0x20] sm:$0xf]
    %v117 = vld [vmem:[#allocation2 + $0x24] sm:$0xf]
    %v118 = vld [vmem:[#allocation2 + $0x28] sm:$0xf]
    %v119 = vld [vmem:[#allocation2 + $0x2c] sm:$0xf]
    %v120 = vld [vmem:[#allocation2 + $0x30] sm:$0xf]
    %v121 = vld [vmem:[#allocation2 + $0x34] sm:$0xf]
    %v122 = vld [vmem:[#allocation2 + $0x38] sm:$0xf]
    %v123 = vld [vmem:[#allocation2 + $0x3c] sm:$0xf]
    %v124 = vld [vmem:[#allocation5] sm:$0xff]
    %v125 = vld [vmem:[#allocation5 + $0x8] sm:$0xff]
    %v126 = vld [vmem:[#allocation5 + $0x10] sm:$0xff]
    %v127 = vld [vmem:[#allocation5 + $0x18] sm:$0xff]
    %v128 = vld [vmem:[#allocation5 + $0x20] sm:$0xff]
    %v129 = vld [vmem:[#allocation5 + $0x28] sm:$0xff]
    %v130 = vld [vmem:[#allocation5 + $0x30] sm:$0xff]
    %v131 = vld [vmem:[#allocation5 + $0x38] sm:$0xff]
    %v132 = vld [vmem:[#allocation5 + $0x40] sm:$0xff]
    %v133 = vld [vmem:[#allocation5 + $0x48] sm:$0xff]
    %v134 = vld [vmem:[#allocation5 + $0x50] sm:$0xff]
    %v135 = vld [vmem:[#allocation5 + $0x58] sm:$0xff]
    %v136 = vld [vmem:[#allocation5 + $0x60] sm:$0xff]
    %v137 = vld [vmem:[#allocation5 + $0x68] sm:$0xff]
    %v138 = vld [vmem:[#allocation5 + $0x70] sm:$0xff]
    %v139 = vld [vmem:[#allocation5 + $0x78] sm:$0xff]
    %v140 = vld [vmem:[#allocation7] sm:$0xf]
    %v141 = vld [vmem:[#allocation7 + $0x4] sm:$0xf]
    %v142 = vld [vmem:[#allocation7 + $0x8] sm:$0xf]
    %v143 = vld [vmem:[#allocation7 + $0xc] sm:$0xf]
    %v144 = vld [vmem:[#allocation7 + $0x10] sm:$0xf]
    %v145 = vld [vmem:[#allocation7 + $0x14] sm:$0xf]
    %v146 = vld [vmem:[#allocation7 + $0x18] sm:$0xf]
    %v147 = vld [vmem:[#allocation7 + $0x1c] sm:$0xf]
    %v148 = vld [vmem:[#allocation7 + $0x20] sm:$0xf]
    %v149 = vld [vmem:[#allocation7 + $0x24] sm:$0xf]
    %v150 = vld [vmem:[#allocation7 + $0x28] sm:$0xf]
    %v151 = vld [vmem:[#allocation7 + $0x2c] sm:$0xf]
    %v152 = vld [vmem:[#allocation7 + $0x30] sm:$0xf]
    %v153 = vld [vmem:[#allocation7 + $0x34] sm:$0xf]
    %v154 = vld [vmem:[#allocation7 + $0x38] sm:$0xf]
    %v155 = vld [vmem:[#allocation7 + $0x3c] sm:$0xf]
    %v156 = vld [vmem:[%s3] sm:$0x1]
    %v157 = vpack.c.bf16 %v125, %v124
    %v158 = vpack.c.bf16 %v127, %v126
    %v159 = vpack.c.bf16 %v129, %v128
    %v160 = vpack.c.bf16 %v131, %v130
    %v161 = vpack.c.bf16 %v133, %v132
    %v162 = vpack.c.bf16 %v135, %v134
    %v163 = vpack.c.bf16 %v137, %v136
    %v164 = vpack.c.bf16 %v139, %v138
    %v181 = vunpack.c.l.b16 %v140
    %v182 = vunpack.c.l.b16 %v141
    %v183 = vunpack.c.l.b16 %v142
    %v184 = vunpack.c.l.b16 %v143
    %v185 = vunpack.c.l.b16 %v144
    %v186 = vunpack.c.l.b16 %v145
    %v187 = vunpack.c.l.b16 %v146
    %v188 = vunpack.c.l.b16 %v147
    %v189 = vunpack.c.l.b16 %v148
    %v190 = vunpack.c.l.b16 %v149
    %v191 = vunpack.c.l.b16 %v150
    %v192 = vunpack.c.l.b16 %v151
    %v193 = vunpack.c.l.b16 %v152
    %v194 = vunpack.c.l.b16 %v153
    %v195 = vunpack.c.l.b16 %v154
    %v196 = vunpack.c.l.b16 %v155
    %v197 = vpack.c.b16 %v182, %v181
    %v198 = vpack.c.b16 %v184, %v183
    %v199 = vpack.c.b16 %v186, %v185
    %v200 = vpack.c.b16 %v188, %v187
    %v201 = vpack.c.b16 %v190, %v189
    %v202 = vpack.c.b16 %v192, %v191
    %v203 = vpack.c.b16 %v194, %v193
    %v204 = vpack.c.b16 %v196, %v195
    %213 = vmatpush.bf16.msra.mxu0 %v204
    %214 = vmatpush.bf16.msra.mxu0 %v203
    %215 = vmatpush.bf16.msra.mxu0 %v202
    %216 = vmatpush.bf16.msra.mxu0 %v201
    %217 = vmatpush.bf16.msra.mxu0 %v200
    %218 = vmatpush.bf16.msra.mxu0 %v199
    %219 = vmatpush.bf16.msra.mxu0 %v198
    %220 = vmatpush.bf16.msra.mxu0 %v197
    %221 = vmatmul.bf16.gmra.mxu0 %v157
    %v222 = vpop.f32.mrf.mxu0
    %v223 = vadd.f32 0.0, %v222
    %v224 = vpop.f32.mrf.mxu0
    %v225 = vadd.f32 0.0, %v224
    %226 = vmatmul.bf16.gmra.mxu0 %v158
    %v227 = vpop.f32.mrf.mxu0
    %v228 = vadd.f32 0.0, %v227
    %v229 = vpop.f32.mrf.mxu0
    %v230 = vadd.f32 0.0, %v229
    %231 = vmatmul.bf16.gmra.mxu0 %v159
    %v232 = vpop.f32.mrf.mxu0
    %v233 = vadd.f32 0.0, %v232
    %v234 = vpop.f32.mrf.mxu0
    %v235 = vadd.f32 0.0, %v234
    %236 = vmatmul.bf16.gmra.mxu0 %v160
    %v237 = vpop.f32.mrf.mxu0
    %v238 = vadd.f32 0.0, %v237
    %v239 = vpop.f32.mrf.mxu0
    %v240 = vadd.f32 0.0, %v239
    %241 = vmatmul.bf16.gmra.mxu0 %v161
    %v242 = vpop.f32.mrf.mxu0
    %v243 = vadd.f32 0.0, %v242
    %v244 = vpop.f32.mrf.mxu0
    %v245 = vadd.f32 0.0, %v244
    %246 = vmatmul.bf16.gmra.mxu0 %v162
    %v247 = vpop.f32.mrf.mxu0
    %v248 = vadd.f32 0.0, %v247
    %v249 = vpop.f32.mrf.mxu0
    %v250 = vadd.f32 0.0, %v249
    %251 = vmatmul.bf16.gmra.mxu0 %v163
    %v252 = vpop.f32.mrf.mxu0
    %v253 = vadd.f32 0.0, %v252
    %v254 = vpop.f32.mrf.mxu0
    %v255 = vadd.f32 0.0, %v254
    %256 = vmatmul.bf16.gmra.mxu0 %v164
    %v257 = vpop.f32.mrf.mxu0
    %v258 = vadd.f32 0.0, %v257
    %v259 = vpop.f32.mrf.mxu0
    %v260 = vadd.f32 0.0, %v259
    %261 = vdwg.mxu0
    %v262 = vpack.c.bf16 %v225, %v223
    %v263 = vpack.c.bf16 %v230, %v228
    %v264 = vpack.c.bf16 %v235, %v233
    %v265 = vpack.c.bf16 %v240, %v238
    %v266 = vpack.c.bf16 %v245, %v243
    %v267 = vpack.c.bf16 %v250, %v248
    %v268 = vpack.c.bf16 %v255, %v253
    %v269 = vpack.c.bf16 %v260, %v258
    %v271 = vperm.slane %v156, 0
    %v289 = vunpack.c.l.b16 %v108
    %v290 = vunpack.c.l.b16 %v109
    %v291 = vunpack.c.l.b16 %v110
    %v292 = vunpack.c.l.b16 %v111
    %v293 = vunpack.c.l.b16 %v112
    %v294 = vunpack.c.l.b16 %v113
    %v295 = vunpack.c.l.b16 %v114
    %v296 = vunpack.c.l.b16 %v115
    %v297 = vunpack.c.l.b16 %v116
    %v298 = vunpack.c.l.b16 %v117
    %v299 = vunpack.c.l.b16 %v118
    %v300 = vunpack.c.l.b16 %v119
    %v301 = vunpack.c.l.b16 %v120
    %v302 = vunpack.c.l.b16 %v121
    %v303 = vunpack.c.l.b16 %v122
    %v304 = vunpack.c.l.b16 %v123
    %v305 = vpack.c.b16 %v290, %v289
    %v306 = vpack.c.b16 %v292, %v291
    %v307 = vpack.c.b16 %v294, %v293
    %v308 = vpack.c.b16 %v296, %v295
    %v309 = vpack.c.b16 %v298, %v297
    %v310 = vpack.c.b16 %v300, %v299
    %v311 = vpack.c.b16 %v302, %v301
    %v312 = vpack.c.b16 %v304, %v303
    %321 = vmatpush.bf16.msra.mxu0 %v269
    %322 = vmatpush.bf16.msra.mxu0 %v268
    %323 = vmatpush.bf16.msra.mxu0 %v267
    %324 = vmatpush.bf16.msra.mxu0 %v266
    %325 = vmatpush.bf16.msra.mxu0 %v265
    %326 = vmatpush.bf16.msra.mxu0 %v264
    %327 = vmatpush.bf16.msra.mxu0 %v263
    %328 = vmatpush.bf16.msra.mxu0 %v262
    %329 = vmatmul.bf16.gmra.mxu0 %v305
    %v330 = vpop.f32.mrf.mxu0
    %v331 = vadd.f32 %v271, %v330
    %v332 = vpop.f32.mrf.mxu0
    %v333 = vadd.f32 %v271, %v332
    %334 = vmatmul.bf16.gmra.mxu0 %v306
    %v335 = vpop.f32.mrf.mxu0
    %v336 = vadd.f32 %v271, %v335
    %v337 = vpop.f32.mrf.mxu0
    %v338 = vadd.f32 %v271, %v337
    %339 = vmatmul.bf16.gmra.mxu0 %v307
    %v340 = vpop.f32.mrf.mxu0
    %v341 = vadd.f32 %v271, %v340
    %v342 = vpop.f32.mrf.mxu0
    %v343 = vadd.f32 %v271, %v342
    %344 = vmatmul.bf16.gmra.mxu0 %v308
    %v345 = vpop.f32.mrf.mxu0
    %v346 = vadd.f32 %v271, %v345
    %v347 = vpop.f32.mrf.mxu0
    %v348 = vadd.f32 %v271, %v347
    %349 = vmatmul.bf16.gmra.mxu0 %v309
    %v350 = vpop.f32.mrf.mxu0
    %v351 = vadd.f32 %v271, %v350
    %v352 = vpop.f32.mrf.mxu0
    %v353 = vadd.f32 %v271, %v352
    %354 = vmatmul.bf16.gmra.mxu0 %v310
    %v355 = vpop.f32.mrf.mxu0
    %v356 = vadd.f32 %v271, %v355
    %v357 = vpop.f32.mrf.mxu0
    %v358 = vadd.f32 %v271, %v357
    %359 = vmatmul.bf16.gmra.mxu0 %v311
    %v360 = vpop.f32.mrf.mxu0
    %v361 = vadd.f32 %v271, %v360
    %v362 = vpop.f32.mrf.mxu0
    %v363 = vadd.f32 %v271, %v362
    %364 = vmatmul.bf16.gmra.mxu0 %v312
    %v365 = vpop.f32.mrf.mxu0
    %v366 = vadd.f32 %v271, %v365
    %v367 = vpop.f32.mrf.mxu0
    %v368 = vadd.f32 %v271, %v367
    %369 = vdwg.mxu0
    %v370 = vmax.f32 %v331, 0.0
    %v371 = vmax.f32 %v333, 0.0
    %v372 = vmax.f32 %v336, 0.0
    %v373 = vmax.f32 %v338, 0.0
    %v374 = vmax.f32 %v341, 0.0
    %v375 = vmax.f32 %v343, 0.0
    %v376 = vmax.f32 %v346, 0.0
    %v377 = vmax.f32 %v348, 0.0
    %v378 = vmax.f32 %v351, 0.0
    %v379 = vmax.f32 %v353, 0.0
    %v380 = vmax.f32 %v356, 0.0
    %v381 = vmax.f32 %v358, 0.0
    %v382 = vmax.f32 %v361, 0.0
    %v383 = vmax.f32 %v363, 0.0
    %v384 = vmax.f32 %v366, 0.0
    %v385 = vmax.f32 %v368, 0.0
    %v386 = vld [vmem:[#allocation8] sm:$0xf]
    %v387 = vld [vmem:[#allocation8 + $0x4] sm:$0xf]
    %v388 = vld [vmem:[#allocation8 + $0x8] sm:$0xf]
    %v389 = vld [vmem:[#allocation8 + $0xc] sm:$0xf]
    %v390 = vld [vmem:[#allocation8 + $0x10] sm:$0xf]
    %v391 = vld [vmem:[#allocation8 + $0x14] sm:$0xf]
    %v392 = vld [vmem:[#allocation8 + $0x18] sm:$0xf]
    %v393 = vld [vmem:[#allocation8 + $0x1c] sm:$0xf]
    %v394 = vld [vmem:[#allocation8 + $0x20] sm:$0xf]
    %v395 = vld [vmem:[#allocation8 + $0x24] sm:$0xf]
    %v396 = vld [vmem:[#allocation8 + $0x28] sm:$0xf]
    %v397 = vld [vmem:[#allocation8 + $0x2c] sm:$0xf]
    %v398 = vld [vmem:[#allocation8 + $0x30] sm:$0xf]
    %v399 = vld [vmem:[#allocation8 + $0x34] sm:$0xf]
    %v400 = vld [vmem:[#allocation8 + $0x38] sm:$0xf]
    %v401 = vld [vmem:[#allocation8 + $0x3c] sm:$0xf]
    %v402 = vld [vmem:[%s5] sm:$0x1]
    %v403 = vpack.c.bf16 %v371, %v370
    %v404 = vpack.c.bf16 %v373, %v372
    %v405 = vpack.c.bf16 %v375, %v374
    %v406 = vpack.c.bf16 %v377, %v376
    %v407 = vpack.c.bf16 %v379, %v378
    %v408 = vpack.c.bf16 %v381, %v380
    %v409 = vpack.c.bf16 %v383, %v382
    %v410 = vpack.c.bf16 %v385, %v384
    %v427 = vunpack.c.l.b16 %v386
    %v428 = vunpack.c.l.b16 %v387
    %v429 = vunpack.c.l.b16 %v388
    %v430 = vunpack.c.l.b16 %v389
    %v431 = vunpack.c.l.b16 %v390
    %v432 = vunpack.c.l.b16 %v391
    %v433 = vunpack.c.l.b16 %v392
    %v434 = vunpack.c.l.b16 %v393
    %v435 = vunpack.c.l.b16 %v394
    %v436 = vunpack.c.l.b16 %v395
    %v437 = vunpack.c.l.b16 %v396
    %v438 = vunpack.c.l.b16 %v397
    %v439 = vunpack.c.l.b16 %v398
    %v440 = vunpack.c.l.b16 %v399
    %v441 = vunpack.c.l.b16 %v400
    %v442 = vunpack.c.l.b16 %v401
    %v443 = vpack.c.b16 %v428, %v427
    %v444 = vpack.c.b16 %v430, %v429
    %v445 = vpack.c.b16 %v432, %v431
    %v446 = vpack.c.b16 %v434, %v433
    %v447 = vpack.c.b16 %v436, %v435
    %v448 = vpack.c.b16 %v438, %v437
    %v449 = vpack.c.b16 %v440, %v439
    %v450 = vpack.c.b16 %v442, %v441
    %459 = vmatpush.bf16.msra.mxu0 %v450
    %460 = vmatpush.bf16.msra.mxu0 %v449
    %461 = vmatpush.bf16.msra.mxu0 %v448
    %462 = vmatpush.bf16.msra.mxu0 %v447
    %463 = vmatpush.bf16.msra.mxu0 %v446
    %464 = vmatpush.bf16.msra.mxu0 %v445
    %465 = vmatpush.bf16.msra.mxu0 %v444
    %466 = vmatpush.bf16.msra.mxu0 %v443
    %467 = vmatmul.bf16.gmra.mxu0 %v403
    %v468 = vpop.f32.mrf.mxu0
    %v469 = vadd.f32 0.0, %v468
    %v470 = vpop.f32.mrf.mxu0
    %v471 = vadd.f32 0.0, %v470
    %472 = vmatmul.bf16.gmra.mxu0 %v404
    %v473 = vpop.f32.mrf.mxu0
    %v474 = vadd.f32 0.0, %v473
    %v475 = vpop.f32.mrf.mxu0
    %v476 = vadd.f32 0.0, %v475
    %477 = vmatmul.bf16.gmra.mxu0 %v405
    %v478 = vpop.f32.mrf.mxu0
    %v479 = vadd.f32 0.0, %v478
    %v480 = vpop.f32.mrf.mxu0
    %v481 = vadd.f32 0.0, %v480
    %482 = vmatmul.bf16.gmra.mxu0 %v406
    %v483 = vpop.f32.mrf.mxu0
    %v484 = vadd.f32 0.0, %v483
    %v485 = vpop.f32.mrf.mxu0
    %v486 = vadd.f32 0.0, %v485
    %487 = vmatmul.bf16.gmra.mxu0 %v407
    %v488 = vpop.f32.mrf.mxu0
    %v489 = vadd.f32 0.0, %v488
    %v490 = vpop.f32.mrf.mxu0
    %v491 = vadd.f32 0.0, %v490
    %492 = vmatmul.bf16.gmra.mxu0 %v408
    %v493 = vpop.f32.mrf.mxu0
    %v494 = vadd.f32 0.0, %v493
    %v495 = vpop.f32.mrf.mxu0
    %v496 = vadd.f32 0.0, %v495
    %497 = vmatmul.bf16.gmra.mxu0 %v409
    %v498 = vpop.f32.mrf.mxu0
    %v499 = vadd.f32 0.0, %v498
    %v500 = vpop.f32.mrf.mxu0
    %v501 = vadd.f32 0.0, %v500
    %502 = vmatmul.bf16.gmra.mxu0 %v410
    %v503 = vpop.f32.mrf.mxu0
    %v504 = vadd.f32 0.0, %v503
    %v505 = vpop.f32.mrf.mxu0
    %v506 = vadd.f32 0.0, %v505
    %507 = vdwg.mxu0
    %v508 = vpack.c.bf16 %v471, %v469
    %v509 = vpack.c.bf16 %v476, %v474
    %v510 = vpack.c.bf16 %v481, %v479
    %v511 = vpack.c.bf16 %v486, %v484
    %v512 = vpack.c.bf16 %v491, %v489
    %v513 = vpack.c.bf16 %v496, %v494
    %v514 = vpack.c.bf16 %v501, %v499
    %v515 = vpack.c.bf16 %v506, %v504
    %v517 = vperm.slane %v402, 0
    %519 = vmatpush.bf16.msra.mxu0 %v515
    %520 = vmatpush.bf16.msra.mxu0 %v514
    %521 = vmatpush.bf16.msra.mxu0 %v513
    %522 = vmatpush.bf16.msra.mxu0 %v512
    %523 = vmatpush.bf16.msra.mxu0 %v511
    %524 = vmatpush.bf16.msra.mxu0 %v510
    %525 = vmatpush.bf16.msra.mxu0 %v509
    %526 = vmatpush.bf16.msra.mxu0 %v508
    %527 = vmatmul.bf16.gmra.mxu0 %v305
    %v528 = vpop.f32.mrf.mxu0
    %v529 = vadd.f32 %v517, %v528
    %v530 = vpop.f32.mrf.mxu0
    %v531 = vadd.f32 %v517, %v530
    %532 = vmatmul.bf16.gmra.mxu0 %v306
    %v533 = vpop.f32.mrf.mxu0
    %v534 = vadd.f32 %v517, %v533
    %v535 = vpop.f32.mrf.mxu0
    %v536 = vadd.f32 %v517, %v535
    %537 = vmatmul.bf16.gmra.mxu0 %v307
    %v538 = vpop.f32.mrf.mxu0
    %v539 = vadd.f32 %v517, %v538
    %v540 = vpop.f32.mrf.mxu0
    %v541 = vadd.f32 %v517, %v540
    %542 = vmatmul.bf16.gmra.mxu0 %v308
    %v543 = vpop.f32.mrf.mxu0
    %v544 = vadd.f32 %v517, %v543
    %v545 = vpop.f32.mrf.mxu0
    %v546 = vadd.f32 %v517, %v545
    %547 = vmatmul.bf16.gmra.mxu0 %v309
    %v548 = vpop.f32.mrf.mxu0
    %v549 = vadd.f32 %v517, %v548
    %v550 = vpop.f32.mrf.mxu0
    %v551 = vadd.f32 %v517, %v550
    %552 = vmatmul.bf16.gmra.mxu0 %v310
    %v553 = vpop.f32.mrf.mxu0
    %v554 = vadd.f32 %v517, %v553
    %v555 = vpop.f32.mrf.mxu0
    %v556 = vadd.f32 %v517, %v555
    %557 = vmatmul.bf16.gmra.mxu0 %v311
    %v558 = vpop.f32.mrf.mxu0
    %v559 = vadd.f32 %v517, %v558
    %v560 = vpop.f32.mrf.mxu0
    %v561 = vadd.f32 %v517, %v560
    %562 = vmatmul.bf16.gmra.mxu0 %v312
    %v563 = vpop.f32.mrf.mxu0
    %v564 = vadd.f32 %v517, %v563
    %v565 = vpop.f32.mrf.mxu0
    %v566 = vadd.f32 %v517, %v565
    %567 = vdwg.mxu0
    %v568 = vmax.f32 %v529, 0.0
    %v569 = vmax.f32 %v531, 0.0
    %v570 = vmax.f32 %v534, 0.0
    %v571 = vmax.f32 %v536, 0.0
    %v572 = vmax.f32 %v539, 0.0
    %v573 = vmax.f32 %v541, 0.0
    %v574 = vmax.f32 %v544, 0.0
    %v575 = vmax.f32 %v546, 0.0
    %v576 = vmax.f32 %v549, 0.0
    %v577 = vmax.f32 %v551, 0.0
    %v578 = vmax.f32 %v554, 0.0
    %v579 = vmax.f32 %v556, 0.0
    %v580 = vmax.f32 %v559, 0.0
    %v581 = vmax.f32 %v561, 0.0
    %v582 = vmax.f32 %v564, 0.0
    %v583 = vmax.f32 %v566, 0.0
    %v584 = vld [vmem:[#allocation10] sm:$0xf]
    %v585 = vld [vmem:[#allocation10 + $0x4] sm:$0xf]
    %v586 = vld [vmem:[#allocation10 + $0x8] sm:$0xf]
    %v587 = vld [vmem:[#allocation10 + $0xc] sm:$0xf]
    %v588 = vld [vmem:[#allocation10 + $0x10] sm:$0xf]
    %v589 = vld [vmem:[#allocation10 + $0x14] sm:$0xf]
    %v590 = vld [vmem:[#allocation10 + $0x18] sm:$0xf]
    %v591 = vld [vmem:[#allocation10 + $0x1c] sm:$0xf]
    %v592 = vld [vmem:[#allocation10 + $0x20] sm:$0xf]
    %v593 = vld [vmem:[#allocation10 + $0x24] sm:$0xf]
    %v594 = vld [vmem:[#allocation10 + $0x28] sm:$0xf]
    %v595 = vld [vmem:[#allocation10 + $0x2c] sm:$0xf]
    %v596 = vld [vmem:[#allocation10 + $0x30] sm:$0xf]
    %v597 = vld [vmem:[#allocation10 + $0x34] sm:$0xf]
    %v598 = vld [vmem:[#allocation10 + $0x38] sm:$0xf]
    %v599 = vld [vmem:[#allocation10 + $0x3c] sm:$0xf]
    %v600 = vld [vmem:[%s7] sm:$0x1]
    %v601 = vpack.c.bf16 %v569, %v568
    %v602 = vpack.c.bf16 %v571, %v570
    %v603 = vpack.c.bf16 %v573, %v572
    %v604 = vpack.c.bf16 %v575, %v574
    %v605 = vpack.c.bf16 %v577, %v576
    %v606 = vpack.c.bf16 %v579, %v578
    %v607 = vpack.c.bf16 %v581, %v580
    %v608 = vpack.c.bf16 %v583, %v582
    %v625 = vunpack.c.l.b16 %v584
    %v626 = vunpack.c.l.b16 %v585
    %v627 = vunpack.c.l.b16 %v586
    %v628 = vunpack.c.l.b16 %v587
    %v629 = vunpack.c.l.b16 %v588
    %v630 = vunpack.c.l.b16 %v589
    %v631 = vunpack.c.l.b16 %v590
    %v632 = vunpack.c.l.b16 %v591
    %v633 = vunpack.c.l.b16 %v592
    %v634 = vunpack.c.l.b16 %v593
    %v635 = vunpack.c.l.b16 %v594
    %v636 = vunpack.c.l.b16 %v595
    %v637 = vunpack.c.l.b16 %v596
    %v638 = vunpack.c.l.b16 %v597
    %v639 = vunpack.c.l.b16 %v598
    %v640 = vunpack.c.l.b16 %v599
    %v641 = vpack.c.b16 %v626, %v625
    %v642 = vpack.c.b16 %v628, %v627
    %v643 = vpack.c.b16 %v630, %v629
    %v644 = vpack.c.b16 %v632, %v631
    %v645 = vpack.c.b16 %v634, %v633
    %v646 = vpack.c.b16 %v636, %v635
    %v647 = vpack.c.b16 %v638, %v637
    %v648 = vpack.c.b16 %v640, %v639
    %657 = vmatpush.bf16.msra.mxu0 %v648
    %658 = vmatpush.bf16.msra.mxu0 %v647
    %659 = vmatpush.bf16.msra.mxu0 %v646
    %660 = vmatpush.bf16.msra.mxu0 %v645
    %661 = vmatpush.bf16.msra.mxu0 %v644
    %662 = vmatpush.bf16.msra.mxu0 %v643
    %663 = vmatpush.bf16.msra.mxu0 %v642
    %664 = vmatpush.bf16.msra.mxu0 %v641
    %665 = vmatmul.bf16.gmra.mxu0 %v601
    %v666 = vpop.f32.mrf.mxu0
    %v667 = vadd.f32 0.0, %v666
    %v668 = vpop.f32.mrf.mxu0
    %v669 = vadd.f32 0.0, %v668
    %670 = vmatmul.bf16.gmra.mxu0 %v602
    %v671 = vpop.f32.mrf.mxu0
    %v672 = vadd.f32 0.0, %v671
    %v673 = vpop.f32.mrf.mxu0
    %v674 = vadd.f32 0.0, %v673
    %675 = vmatmul.bf16.gmra.mxu0 %v603
    %v676 = vpop.f32.mrf.mxu0
    %v677 = vadd.f32 0.0, %v676
    %v678 = vpop.f32.mrf.mxu0
    %v679 = vadd.f32 0.0, %v678
    %680 = vmatmul.bf16.gmra.mxu0 %v604
    %v681 = vpop.f32.mrf.mxu0
    %v682 = vadd.f32 0.0, %v681
    %v683 = vpop.f32.mrf.mxu0
    %v684 = vadd.f32 0.0, %v683
    %685 = vmatmul.bf16.gmra.mxu0 %v605
    %v686 = vpop.f32.mrf.mxu0
    %v687 = vadd.f32 0.0, %v686
    %v688 = vpop.f32.mrf.mxu0
    %v689 = vadd.f32 0.0, %v688
    %690 = vmatmul.bf16.gmra.mxu0 %v606
    %v691 = vpop.f32.mrf.mxu0
    %v692 = vadd.f32 0.0, %v691
    %v693 = vpop.f32.mrf.mxu0
    %v694 = vadd.f32 0.0, %v693
    %695 = vmatmul.bf16.gmra.mxu0 %v607
    %v696 = vpop.f32.mrf.mxu0
    %v697 = vadd.f32 0.0, %v696
    %v698 = vpop.f32.mrf.mxu0
    %v699 = vadd.f32 0.0, %v698
    %700 = vmatmul.bf16.gmra.mxu0 %v608
    %v701 = vpop.f32.mrf.mxu0
    %v702 = vadd.f32 0.0, %v701
    %v703 = vpop.f32.mrf.mxu0
    %v704 = vadd.f32 0.0, %v703
    %705 = vdwg.mxu0
    %v706 = vpack.c.bf16 %v669, %v667
    %v707 = vpack.c.bf16 %v674, %v672
    %v708 = vpack.c.bf16 %v679, %v677
    %v709 = vpack.c.bf16 %v684, %v682
    %v710 = vpack.c.bf16 %v689, %v687
    %v711 = vpack.c.bf16 %v694, %v692
    %v712 = vpack.c.bf16 %v699, %v697
    %v713 = vpack.c.bf16 %v704, %v702
    %v715 = vperm.slane %v600, 0
    %717 = vmatpush.bf16.msra.mxu0 %v713
    %718 = vmatpush.bf16.msra.mxu0 %v712
    %719 = vmatpush.bf16.msra.mxu0 %v711
    %720 = vmatpush.bf16.msra.mxu0 %v710
    %721 = vmatpush.bf16.msra.mxu0 %v709
    %722 = vmatpush.bf16.msra.mxu0 %v708
    %723 = vmatpush.bf16.msra.mxu0 %v707
    %724 = vmatpush.bf16.msra.mxu0 %v706
    %725 = vmatmul.bf16.gmra.mxu0 %v305
    %v726 = vpop.f32.mrf.mxu0
    %v727 = vadd.f32 %v715, %v726
    %v728 = vpop.f32.mrf.mxu0
    %v729 = vadd.f32 %v715, %v728
    %730 = vmatmul.bf16.gmra.mxu0 %v306
    %v731 = vpop.f32.mrf.mxu0
    %v732 = vadd.f32 %v715, %v731
    %v733 = vpop.f32.mrf.mxu0
    %v734 = vadd.f32 %v715, %v733
    %735 = vmatmul.bf16.gmra.mxu0 %v307
    %v736 = vpop.f32.mrf.mxu0
    %v737 = vadd.f32 %v715, %v736
    %v738 = vpop.f32.mrf.mxu0
    %v739 = vadd.f32 %v715, %v738
    %740 = vmatmul.bf16.gmra.mxu0 %v308
    %v741 = vpop.f32.mrf.mxu0
    %v742 = vadd.f32 %v715, %v741
    %v743 = vpop.f32.mrf.mxu0
    %v744 = vadd.f32 %v715, %v743
    %745 = vmatmul.bf16.gmra.mxu0 %v309
    %v746 = vpop.f32.mrf.mxu0
    %v747 = vadd.f32 %v715, %v746
    %v748 = vpop.f32.mrf.mxu0
    %v749 = vadd.f32 %v715, %v748
    %750 = vmatmul.bf16.gmra.mxu0 %v310
    %v751 = vpop.f32.mrf.mxu0
    %v752 = vadd.f32 %v715, %v751
    %v753 = vpop.f32.mrf.mxu0
    %v754 = vadd.f32 %v715, %v753
    %755 = vmatmul.bf16.gmra.mxu0 %v311
    %v756 = vpop.f32.mrf.mxu0
    %v757 = vadd.f32 %v715, %v756
    %v758 = vpop.f32.mrf.mxu0
    %v759 = vadd.f32 %v715, %v758
    %760 = vmatmul.bf16.gmra.mxu0 %v312
    %v761 = vpop.f32.mrf.mxu0
    %v762 = vadd.f32 %v715, %v761
    %v763 = vpop.f32.mrf.mxu0
    %v764 = vadd.f32 %v715, %v763
    %765 = vdwg.mxu0
    %766 = vst [vmem:[#allocation11] sm:$0xff] %v727
    %767 = vst [vmem:[#allocation11 + $0x8] sm:$0xff] %v729
    %768 = vst [vmem:[#allocation11 + $0x10] sm:$0xff] %v732
    %769 = vst [vmem:[#allocation11 + $0x18] sm:$0xff] %v734
    %770 = vst [vmem:[#allocation11 + $0x20] sm:$0xff] %v737
    %771 = vst [vmem:[#allocation11 + $0x28] sm:$0xff] %v739
    %772 = vst [vmem:[#allocation11 + $0x30] sm:$0xff] %v742
    %773 = vst [vmem:[#allocation11 + $0x38] sm:$0xff] %v744
    %774 = vst [vmem:[#allocation11 + $0x40] sm:$0xff] %v747
    %775 = vst [vmem:[#allocation11 + $0x48] sm:$0xff] %v749
    %776 = vst [vmem:[#allocation11 + $0x50] sm:$0xff] %v752
    %777 = vst [vmem:[#allocation11 + $0x58] sm:$0xff] %v754
    %778 = vst [vmem:[#allocation11 + $0x60] sm:$0xff] %v757
    %779 = vst [vmem:[#allocation11 + $0x68] sm:$0xff] %v759
    %780 = vst [vmem:[#allocation11 + $0x70] sm:$0xff] %v762
    %781 = vst [vmem:[#allocation11 + $0x78] sm:$0xff] %v764
    // Predicated region
    $region54: #{tpu_custom_call.1} parent=1 // pred_check
      _
    $region55: #{tpu_custom_call.1} parent=1 // pred_check_branch
      %783 = sbr.rel (0) target = $region57
    $region56: #{tpu_custom_call.1} parent=1 // pred_region
      %785 = vsyncadd [#allocation4], 0
      %s786 = sshll.u32 [#allocation11], 4
      %s787 = int_to_ptr.vmem [resolvable:$true] %s786
      %s788 = sshll.u32 %s8, 4
      %s789 = int_to_ptr.hbm [resolvable:$true] %s788
      %794 = dma.vmem_to_hbm [thread:$0]  %s787, 2048, %s789, [#allocation4], 128, 128, 8
    $region57: #{tpu_custom_call.1} parent=1 // pred_fallthru
      _
    // Predicated region
    $region58: #{tpu_custom_call.1} parent=1 // pred_check
      _
    $region59: #{tpu_custom_call.1} parent=1 // pred_check_branch
      %796 = sbr.rel (0) target = $region61
    $region60: #{tpu_custom_call.1} parent=1 // pred_region
      %798 = dma.done [#allocation4], 2048
    $region61: #{tpu_custom_call.1} parent=1 // pred_fallthru
      _
    %799 = vsyncpa [#allocation3], 1
    %800 = vsyncpa [#allocation6], 1
    %801 = vsyncpa [#allocation9], 1
    %802 = vsyncpa [#allocation4], 1

</llo_original>
